<compile_context>
chip_gen: v5e
topology: v5e:2x2
jax: 0.10.0
libtpu: 0.0.40
codegen_flags: <defaults>
</compile_context>

<pallas_src>
import functools
import math

import jax
import jax.numpy as jnp
from jax.experimental import pallas as pl
from jax.experimental.pallas import tpu as pltpu

_MIB = 1024 * 1024


def _cdiv(a: int, b: int) -> int:
    return -(-a // b)


def _round_up(x: int, m: int) -> int:
    return _cdiv(x, m) * m


def _vmem_capacity_bytes() -> int:
    try:
        return int(pltpu.get_tpu_info().vmem_capacity_bytes)
    except Exception:
        return 64 * _MIB  # conservative default (v7x per-core VMEM)


def _tensorcores_per_chip() -> int:
    # Heuristic: multi-TC / megacore generations benefit from >= 2 grid steps
    # on a "parallel" axis; single-TC chips (v5e/v6e) do not.
    try:
        kind = str(getattr(jax.devices()[0], "device_kind", "")).lower()
        if any(tag in kind for tag in ("v4", "v5p", "v7")):
            return 2
    except Exception:
        pass
    return 1


def _rmsnorm_kernel(x_ref, w_ref, o_ref, *, eps: float, inv_dim: float):
    # x_ref: (tile_rows, dim) input tile; w_ref: (1, dim) f32 weight (resident);
    # o_ref: (tile_rows, dim) output tile. Normalization is per row over lanes.
    x = x_ref[...].astype(jnp.float32)
    ms = jnp.sum(x * x, axis=-1, keepdims=True) * inv_dim  # mean over true dim
    inv = jax.lax.rsqrt(ms + eps)                           # (tile_rows, 1)
    # Re-read x (narrow dtype) so the f32 upcast need not stay live across both
    # passes; math stays in f32 to match the reference exactly.
    o_ref[...] = (x_ref[...].astype(jnp.float32) * inv * w_ref[...]).astype(o_ref.dtype)


def _choose_tile_rows(rows: int, dim: int, itemsize: int, sublane_mult: int,
                      target_tile_bytes: int, ws_budget: int, min_grid: int) -> int:
    def footprint(t: int) -> int:
        # 2x double-buffered input + 2x double-buffered output tiles (x dtype)
        # + headroom for one f32-tile-sized compiler temporary + resident weight.
        return 4 * t * dim * itemsize + t * dim * 4 + dim * 4

    row_bytes = max(1, dim * itemsize)
    target_rows = max(sublane_mult, target_tile_bytes // row_bytes)
    num_tiles = max(min_grid, _cdiv(rows, target_rows))
    if num_tiles == 1:
        # Single block: use the exact row count (block dim == array dim is
        # always legal), so there is no ragged edge and no wasted sublanes.
        tile_rows = rows
    else:
        tile_rows = _round_up(_cdiv(rows, num_tiles), sublane_mult)
    while tile_rows > sublane_mult and footprint(tile_rows) > ws_budget:
        tile_rows = max(sublane_mult, _round_up(tile_rows // 2, sublane_mult))
    return tile_rows


def rmsnorm(x: jax.Array, weight: jax.Array, eps: float = 1e-5,
            tile_rows_override: int | None = None) -> jax.Array:
    """RMSNorm over the last axis. x: (..., dim), weight: (dim,)."""
    orig_shape = x.shape
    dim = orig_shape[-1]
    rows = math.prod(orig_shape[:-1]) if len(orig_shape) > 1 else 1
    if rows == 0 or dim == 0:
        return x

    itemsize = jnp.dtype(x.dtype).itemsize
    sublane_mult = max(8, (8 * 4) // itemsize)  # 8 f32, 16 bf16, 32 int8/fp8

    cap = _vmem_capacity_bytes()
    if cap >= 100 * _MIB:            # v5e / v6e: 128 MiB physical VMEM
        target_tile_bytes = 8 * _MIB
        ws_budget = 48 * _MIB
    else:                            # v7x: 64 MiB physical VMEM
        target_tile_bytes = 4 * _MIB
        ws_budget = 24 * _MIB

    min_grid = 2 if (_tensorcores_per_chip() > 1 and rows >= 2 * sublane_mult) else 1
    if tile_rows_override is not None:
        tile_rows = int(tile_rows_override)
    else:
        tile_rows = _choose_tile_rows(rows, dim, itemsize, sublane_mult,
                                      target_tile_bytes, ws_budget, min_grid)
    grid = (_cdiv(rows, tile_rows),)

    x2d = x.reshape(rows, dim)                              # view, no copy
    w2d = weight.reshape(1, dim).astype(jnp.float32)        # f32 cast hoisted out of kernel

    footprint = 4 * tile_rows * dim * itemsize + tile_rows * dim * 4 + dim * 4
    vmem_limit = int(min(cap, max(footprint + 16 * _MIB, 32 * _MIB)))

    cost = pl.CostEstimate(
        flops=4 * rows * dim,                               # square, reduce-add, 2 scalings
        transcendentals=rows,                               # one rsqrt per row
        bytes_accessed=2 * rows * dim * itemsize + dim * 4,  # read x + write out + weight
    )

    out2d = pl.pallas_call(
        functools.partial(_rmsnorm_kernel, eps=eps, inv_dim=1.0 / dim),
        out_shape=jax.ShapeDtypeStruct((rows, dim), x.dtype),
        grid_spec=pltpu.PrefetchScalarGridSpec(
            num_scalar_prefetch=0,
            grid=grid,
            in_specs=[
                pl.BlockSpec((tile_rows, dim), lambda i: (i, 0)),
                pl.BlockSpec((1, dim), lambda i: (0, 0)),   # constant -> stays resident
            ],
            out_specs=pl.BlockSpec((tile_rows, dim), lambda i: (i, 0)),
        ),
        compiler_params=pltpu.CompilerParams(
            dimension_semantics=("parallel",),
            vmem_limit_bytes=vmem_limit,
        ),
        cost_estimate=cost,
    )(x2d, w2d)

    return out2d.reshape(orig_shape)


def rmsnorm_ref(x: jax.Array, weight: jax.Array, eps: float = 1e-5) -> jax.Array:
    out_dtype = x.dtype
    xf = x.astype(jnp.float32)
    inv = jax.lax.rsqrt(jnp.mean(xf * xf, axis=-1, keepdims=True) + eps)
    return (xf * inv * weight.astype(jnp.float32)).astype(out_dtype)


if __name__ == "__main__":
    key = jax.random.PRNGKey(0)
    k_small, k_big_x, k_big_w, k_odd_x, k_odd_w = jax.random.split(key, 5)

    # Demo-sized shapes implied by the PyTorch module: batch=2, seq=8, hidden=32.
    batch, seq, hidden = 2, 8, 32
    x_small = jax.random.normal(k_small, (batch, seq, hidden), dtype=jnp.bfloat16)
    w_small = jnp.ones((hidden,), dtype=jnp.float32)  # nn.Parameter(torch.ones(dim))

    out_small = jax.block_until_ready(rmsnorm(x_small, w_small, eps=1e-5))
    ref_small = rmsnorm_ref(x_small, w_small, eps=1e-5)
    assert out_small.shape == x_small.shape and out_small.dtype == x_small.dtype
    assert jnp.allclose(out_small.astype(jnp.float32), ref_small.astype(jnp.float32),
                        atol=1e-2, rtol=1e-2)

    # Lane-dense case (hidden % 128 == 0) with non-trivial weight scaling.
    x_big = jax.random.normal(k_big_x, (2, 128, 256), dtype=jnp.bfloat16)
    w_big = 1.0 + 0.1 * jax.random.normal(k_big_w, (256,), dtype=jnp.float32)
    out_big = jax.block_until_ready(rmsnorm(x_big, w_big, eps=1e-5))
    ref_big = rmsnorm_ref(x_big, w_big, eps=1e-5)
    assert jnp.allclose(out_big.astype(jnp.float32), ref_big.astype(jnp.float32),
                        atol=1e-2, rtol=1e-2)

    # Ragged-rows case (rows % tile_rows != 0, forced via override) in f32:
    # exercises the OOB edge block whose results are dropped on writeback.
    x_odd = jax.random.normal(k_odd_x, (3, 25, 32), dtype=jnp.float32)
    w_odd = 1.0 + 0.05 * jax.random.normal(k_odd_w, (32,), dtype=jnp.float32)
    out_odd = jax.block_until_ready(rmsnorm(x_odd, w_odd, eps=1e-5, tile_rows_override=32))
    ref_odd = rmsnorm_ref(x_odd, w_odd, eps=1e-5)
    assert jnp.allclose(out_odd, ref_odd, atol=1e-5, rtol=1e-5)

    print("KERNEL_OK")
</pallas_src>

<mosaic_0001>
module attributes {stable_mosaic.version = 11 : i64} {
  func.func @_rmsnorm_kernel(%arg0: i32, %arg1: memref<16x32xbf16, #tpu.memory_space<vmem>>, %arg2: memref<1x32xf32, #tpu.memory_space<vmem>>, %arg3: memref<16x32xbf16, #tpu.memory_space<vmem>>) attributes {dimension_semantics = [#tpu.dimension_semantics<parallel>], iteration_bounds = array<i64: 1>, scalar_prefetch = 0 : i64, scratch_operands = 0 : i64, tpu.core_type = #tpu.core_type<tc>, window_params = [{transform_indices = @transform_0, window_bounds = array<i64: 16, 32>}, {pipeline_mode = #tpu.pipeline_mode<synchronous>, transform_indices = @transform_1, window_bounds = array<i64: 1, 32>}, {transform_indices = @transform_2, window_bounds = array<i64: 16, 32>}]} {
    %c0 = arith.constant 0 : index
    %c0_0 = arith.constant 0 : index
    %0 = vector.load %arg1[%c0, %c0_0] : memref<16x32xbf16, #tpu.memory_space<vmem>>, vector<16x32xbf16>
    %1 = arith.extf %0 : vector<16x32xbf16> to vector<16x32xf32>
    %2 = arith.mulf %1, %1 : vector<16x32xf32>
    %cst = arith.constant dense<0.000000e+00> : vector<16xf32>
    %3 = vector.multi_reduction <add>, %2, %cst [1] : vector<16x32xf32> to vector<16xf32>
    %4 = vector.shape_cast %3 : vector<16xf32> to vector<16x1xf32>
    %cst_1 = arith.constant 3.125000e-02 : f32
    %5 = vector.broadcast %cst_1 : f32 to vector<16x1xf32>
    %6 = arith.mulf %4, %5 : vector<16x1xf32>
    %cst_2 = arith.constant 9.99999974E-6 : f32
    %7 = vector.broadcast %cst_2 : f32 to vector<16x1xf32>
    %8 = arith.addf %6, %7 : vector<16x1xf32>
    %9 = math.rsqrt %8 : vector<16x1xf32>
    %c0_3 = arith.constant 0 : index
    %c0_4 = arith.constant 0 : index
    %10 = vector.load %arg1[%c0_3, %c0_4] : memref<16x32xbf16, #tpu.memory_space<vmem>>, vector<16x32xbf16>
    %11 = arith.extf %10 : vector<16x32xbf16> to vector<16x32xf32>
    %12 = vector.broadcast %9 : vector<16x1xf32> to vector<16x32xf32>
    %13 = arith.mulf %11, %12 : vector<16x32xf32>
    %c0_5 = arith.constant 0 : index
    %c0_6 = arith.constant 0 : index
    %14 = vector.load %arg2[%c0_5, %c0_6] : memref<1x32xf32, #tpu.memory_space<vmem>>, vector<1x32xf32>
    %15 = vector.broadcast %14 : vector<1x32xf32> to vector<16x32xf32>
    %16 = arith.mulf %13, %15 : vector<16x32xf32>
    %17 = arith.truncf %16 : vector<16x32xf32> to vector<16x32xbf16>
    %c0_7 = arith.constant 0 : index
    %c0_8 = arith.constant 0 : index
    %18 = vector.load %arg3[%c0_7, %c0_8] : memref<16x32xbf16, #tpu.memory_space<vmem>>, vector<16x32xbf16>
    tpu.vector_store %arg3[%c0_7, %c0_8], %17 {strides = array<i32>} : memref<16x32xbf16, #tpu.memory_space<vmem>>, vector<16x32xbf16>,
    return
  }
  func.func @transform_0(%arg0: i32) -> (i32, i32) {
    %c0_i32 = arith.constant 0 : i32
    %c0_i32_0 = arith.constant 0 : i32
    return %arg0, %c0_i32 : i32, i32
  }
  func.func @transform_1(%arg0: i32) -> (i32, i32) {
    %c0_i32 = arith.constant 0 : i32
    %c0_i32_0 = arith.constant 0 : i32
    %c0_i32_1 = arith.constant 0 : i32
    return %c0_i32, %c0_i32_0 : i32, i32
  }
  func.func @transform_2(%arg0: i32) -> (i32, i32) {
    %c0_i32 = arith.constant 0 : i32
    %c0_i32_0 = arith.constant 0 : i32
    return %arg0, %c0_i32 : i32, i32
  }
}

</mosaic_0001>

<llo_original>
// kernel: tpu_custom_call.1
$region0: #{tpu_custom_call.1}
  #allocation0 [shape = 'u32[]', space=smem, size = 0x4, offset = 0x4, fixed_abs, tag = 'smem constant byte address 0x4 - core index']
  #allocation1 [shape = 'u32[72,128]{1,0:T(1,128)}', space=vmem, size = 0x9000, scoped, tag = 'internal scratch']
  %s0 = inlined_call_operand.hbm [shape: bf16[16,32], index: 0, kind: input, shape index: {}]
  %s1 = inlined_call_operand.hbm [shape: f32[1,32], index: 1, kind: input, shape index: {}]
  %s2 = inlined_call_operand.hbm [shape: bf16[16,32], index: 2, kind: output, shape index: {}]
  %s3 = sld [smem:[#allocation0]]
  $region26: #{tpu_custom_call.1} parent=0
    _
  %s5 = ssub.s32 1, %s3
  %s6 = scalar_select 0, %s5, %s3
  $region1: #{tpu_custom_call.1} parent=0
    #allocation2 [shape = 'u8[4096]{0}', space=vmem, size = 0x1000, scoped, tag = 'input window, operand 0, single buffered']
    #allocation3 [shape = 's32[1]{0}', space=sflag, size = 0x4, scoped, tag = 'scoped memory for tpu_custom_call.1']
    #allocation4 [shape = 's32[1]{0}', space=sflag, size = 0x4, scoped, tag = 'scoped memory for tpu_custom_call.1']
    #allocation5 [shape = 'u8[512]{0}', space=vmem, size = 0x400, scoped, tag = 'input window, operand 1, single buffered']
    #allocation6 [shape = 's32[1]{0}', space=sflag, size = 0x4, scoped, tag = 'scoped memory for tpu_custom_call.1']
    #allocation7 [shape = 'u8[4096]{0}', space=vmem, size = 0x1000, scoped, tag = 'output window, operand 0, single buffered']
    %7 = vsyncpa [#allocation3], 0
    %8 = vsyncpa [#allocation6], 0
    %9 = vsyncpa [#allocation4], 0
    // Predicated region
    $region2: #{tpu_custom_call.1} parent=1 // pred_check
      _
    $region3: #{tpu_custom_call.1} parent=1 // pred_check_branch
      %11 = sbr.rel (0) target = $region5
    $region4: #{tpu_custom_call.1} parent=1 // pred_region
      %13 = vsyncadd [#allocation3], 0
      %s14 = sshll.u32 %s0, 4
      %s15 = int_to_ptr.hbm [resolvable:$true] %s14
      %s16 = sshll.u32 [#allocation2], 4
      %s17 = int_to_ptr.vmem [resolvable:$true] %s16
      %22 = dma.hbm_to_vmem [thread:$0]  %s15, 128, %s17, [#allocation3], 64, 64, 4
    $region5: #{tpu_custom_call.1} parent=1 // pred_fallthru
      _
    // Predicated region
    $region6: #{tpu_custom_call.1} parent=1 // pred_check
      _
    $region7: #{tpu_custom_call.1} parent=1 // pred_check_branch
      %24 = sbr.rel (0) target = $region9
    $region8: #{tpu_custom_call.1} parent=1 // pred_region
      %26 = vsyncadd [#allocation6], 0
      %s28 = sshll.u32 %s1, 4
      %s29 = int_to_ptr.hbm [resolvable:$true] %s28
      %s30 = sshll.u32 [#allocation5], 4
      %s31 = int_to_ptr.vmem [resolvable:$true] %s30
      %33 = dma.hbm_to_vmem [thread:$0]  %s29, 16, %s31, [#allocation6]
    $region9: #{tpu_custom_call.1} parent=1 // pred_fallthru
      _
    // Predicated region
    $region10: #{tpu_custom_call.1} parent=1 // pred_check
      _
    $region11: #{tpu_custom_call.1} parent=1 // pred_check_branch
      %35 = sbr.rel (0) target = $region13
    $region12: #{tpu_custom_call.1} parent=1 // pred_region
      %37 = dma.done [#allocation3], 128
    $region13: #{tpu_custom_call.1} parent=1 // pred_fallthru
      _
    // Predicated region
    $region14: #{tpu_custom_call.1} parent=1 // pred_check
      _
    $region15: #{tpu_custom_call.1} parent=1 // pred_check_branch
      %39 = sbr.rel (0) target = $region17
    $region16: #{tpu_custom_call.1} parent=1 // pred_region
      %41 = dma.done [#allocation6], 16
    $region17: #{tpu_custom_call.1} parent=1 // pred_fallthru
      _
    %v42 = vld [vmem:[#allocation2] sm:$0xf]
    %v43 = vld [vmem:[#allocation2 + $0x4] sm:$0xf]
    %v44 = vunpack.c.l.bf16 %v42
    %v45 = vunpack.c.l.bf16 %v43
    %v46 = vmul.f32 %v44, %v44
    %v47 = vmul.f32 %v45, %v45
    %vm48 = vcmask 261120
    %v49 = vsel %vm48, %v46, 0.0
    %50 = vadd.xlane.f32.xlu0 %v49
    %v51 = vpop.xlane.xlu0 %50
    %v52 = vsel %vm48, %v47, 0.0
    %53 = vadd.xlane.f32.xlu0 %v52
    %v54 = vpop.xlane.xlu0 %53
    %v55 = vmul.f32 %v51, 0.03125
    %v56 = vmul.f32 %v54, 0.03125
    %v57 = vadd.f32 %v55, 1e-05
    %v58 = vadd.f32 %v56, 1e-05
    %v59 = vrsqrt.pop %v57
    %v60 = vmul.f32 %v59, %v57
    %v61 = vmul.f32 %v60, %v59
    %v62 = vmul.f32 0.5, %v61
    %v63 = vsub.f32 1.5, %v62
    %v64 = vmul.f32 %v59, %v63
    %vm65 = vweird.f32 %v57
    %vm66 = vweird.f32 %v59
    %vm67 = vmor %vm65, %vm66
    %v68 = vsel %vm67, %v59, %v64
    %v69 = vrsqrt.pop %v58
    %v70 = vmul.f32 %v69, %v58
    %v71 = vmul.f32 %v70, %v69
    %v72 = vmul.f32 0.5, %v71
    %v73 = vsub.f32 1.5, %v72
    %v74 = vmul.f32 %v69, %v73
    %vm75 = vweird.f32 %v58
    %vm76 = vweird.f32 %v69
    %vm77 = vmor %vm75, %vm76
    %v78 = vsel %vm77, %v69, %v74
    %v79 = vmul.f32 %v44, %v68
    %v80 = vmul.f32 %v45, %v78
    %v81 = vld [vmem:[#allocation5] sm:$0x1]
    %v83 = vperm.slane %v81, 0
    %v85 = vmul.f32 %v79, %v83
    %v86 = vmul.f32 %v80, %v83
    %v87 = vpack.c.bf16 %v85, %v85
    %v88 = vpack.c.bf16 %v86, %v86
    %vm89 = vcmask 257024
    %90 = vst.msk [vmem:[#allocation7] sm:$0xf] %vm89, %v87
    %91 = vst.msk [vmem:[#allocation7 + $0x4] sm:$0xf] %vm89, %v88
    // Predicated region
    $region18: #{tpu_custom_call.1} parent=1 // pred_check
      _
    $region19: #{tpu_custom_call.1} parent=1 // pred_check_branch
      %93 = sbr.rel (0) target = $region21
    $region20: #{tpu_custom_call.1} parent=1 // pred_region
      %95 = vsyncadd [#allocation4], 0
      %s96 = sshll.u32 [#allocation7], 4
      %s97 = int_to_ptr.vmem [resolvable:$true] %s96
      %s98 = sshll.u32 %s2, 4
      %s99 = int_to_ptr.hbm [resolvable:$true] %s98
      %104 = dma.vmem_to_hbm [thread:$0]  %s97, 128, %s99, [#allocation4], 64, 64, 4
    $region21: #{tpu_custom_call.1} parent=1 // pred_fallthru
      _
    // Predicated region
    $region22: #{tpu_custom_call.1} parent=1 // pred_check
      _
    $region23: #{tpu_custom_call.1} parent=1 // pred_check_branch
      %106 = sbr.rel (0) target = $region25
    $region24: #{tpu_custom_call.1} parent=1 // pred_region
      %108 = dma.done [#allocation4], 128
    $region25: #{tpu_custom_call.1} parent=1 // pred_fallthru
      _
    %109 = vsyncpa [#allocation3], 1
    %110 = vsyncpa [#allocation6], 1
    %111 = vsyncpa [#allocation4], 1

</llo_original>
